<compile_context>
chip_gen: v7x
topology: tpu7x:2x2x1
jax: 0.10.0
libtpu: 0.0.40
codegen_flags: <defaults>
</compile_context>

<pallas_src>
import functools

import jax
import jax.numpy as jnp
from jax.experimental import pallas as pl
from jax.experimental.pallas import tpu as pltpu

HIDDEN = 128
LANE = 128      # TPU lane width; pad the output/action dim to this
SUBLANE = 8


def _round_up(x, m):
    return ((x + m - 1) // m) * m


def dqn_mlp_kernel(x_ref, w1_ref, b1_ref, w2_ref, b2_ref, w3_ref, b3_ref, o_ref):
    # x / weights arrive as bf16; all matmuls accumulate in f32 on the MXU.
    # layer1 + ReLU (epilogue in f32)
    h1 = jnp.dot(x_ref[...], w1_ref[...], preferred_element_type=jnp.float32)
    h1 = jnp.maximum(h1 + b1_ref[...], 0.0)
    # layer2 + ReLU
    h2 = jnp.dot(h1.astype(jnp.bfloat16), w2_ref[...],
                 preferred_element_type=jnp.float32)
    h2 = jnp.maximum(h2 + b2_ref[...], 0.0)
    # layer3 (no activation), lane-padded to 128 output columns
    out = jnp.dot(h2.astype(jnp.bfloat16), w3_ref[...],
                  preferred_element_type=jnp.float32)
    o_ref[...] = (out + b3_ref[...]).astype(o_ref.dtype)


@functools.partial(jax.jit, static_argnames=("batch_tile",))
def dqn_forward(x, params, *, batch_tile=512):
    """Full DQN MLP forward pass in one batch-tiled Pallas kernel."""
    w1, b1, w2, b2, w3, b3 = params
    B, F = x.shape
    n_actions = w3.shape[1]

    # --- batch tiling ---
    # Small batches (typical acting step): one sublane-aligned tile, minimal pad.
    # Large batches (replay updates): multiple-of-256 tiles to fill the MXU rows.
    if B <= 256:
        TB = _round_up(max(B, 1), SUBLANE)
    else:
        TB = _round_up(min(batch_tile, _round_up(B, 256)), 256)
    B_pad = _round_up(B, TB)
    n_tiles = B_pad // TB

    # --- prepare operands: bf16 MXU inputs, f32 biases, lane-padded layer 3 ---
    x_b = x.astype(jnp.bfloat16)
    if B_pad == B:
        x_p = x_b
    else:
        x_p = jnp.zeros((B_pad, F), jnp.bfloat16).at[:B, :].set(x_b)
    w1_b = w1.astype(jnp.bfloat16)
    w2_b = w2.astype(jnp.bfloat16)
    n_out = _round_up(n_actions, LANE)
    if n_out == n_actions:
        w3_b = w3.astype(jnp.bfloat16)
        b3_p = b3
    else:
        w3_b = jnp.zeros((HIDDEN, n_out), jnp.bfloat16).at[:, :n_actions].set(
            w3.astype(jnp.bfloat16))
        b3_p = jnp.zeros((1, n_out), jnp.float32).at[:, :n_actions].set(b3)

    # --- cost hint for XLA scheduling around the custom call ---
    flops = 2 * B_pad * (F * HIDDEN + HIDDEN * HIDDEN + HIDDEN * n_out)
    bytes_accessed = (x_p.size * 2 + w1_b.size * 2 + w2_b.size * 2 + w3_b.size * 2
                      + b1.size * 4 + b2.size * 4 + b3_p.size * 4
                      + B_pad * n_out * 4)
    cost = pl.CostEstimate(flops=flops, transcendentals=0,
                           bytes_accessed=bytes_accessed)

    resident = lambda i: (0, 0)  # weights/biases: same block every grid step

    out_pad = pl.pallas_call(
        dqn_mlp_kernel,
        out_shape=jax.ShapeDtypeStruct((B_pad, n_out), jnp.float32),
        grid=(n_tiles,),
        in_specs=[
            pl.BlockSpec((TB, F), lambda i: (i, 0)),        # x tile
            pl.BlockSpec((F, HIDDEN), resident),            # w1
            pl.BlockSpec((1, HIDDEN), resident),            # b1
            pl.BlockSpec((HIDDEN, HIDDEN), resident),       # w2
            pl.BlockSpec((1, HIDDEN), resident),            # b2
            pl.BlockSpec((HIDDEN, n_out), resident),        # w3 (lane-padded)
            pl.BlockSpec((1, n_out), resident),             # b3 (lane-padded)
        ],
        out_specs=pl.BlockSpec((TB, n_out), lambda i: (i, 0)),
        compiler_params=pltpu.CompilerParams(
            dimension_semantics=("parallel",),              # v7x: 2 TCs split batch
        ),
        cost_estimate=cost,
    )(x_p, w1_b, b1, w2_b, b2, w3_b, b3_p)

    return out_pad[:B, :n_actions]


def init_params(key, observation_length, n_actions, hidden=HIDDEN):
    """Deterministic init mimicking PyTorch nn.Linear default (U(+/- 1/sqrt(fan_in))).
    Weights are stored [in, out] (transpose of PyTorch's [out, in])."""
    k1, k2, k3, k4, k5, k6 = jax.random.split(key, 6)

    def lin(kw, kb, fan_in, fan_out):
        bound = 1.0 / jnp.sqrt(fan_in)
        w = jax.random.uniform(kw, (fan_in, fan_out), jnp.float32, -bound, bound)
        b = jax.random.uniform(kb, (1, fan_out), jnp.float32, -bound, bound)
        return w, b

    w1, b1 = lin(k1, k2, observation_length, hidden)
    w2, b2 = lin(k3, k4, hidden, hidden)
    w3, b3 = lin(k5, k6, hidden, n_actions)
    return (w1, b1, w2, b2, w3, b3)


def dqn_forward_ref_f32(x, params):
    """Pure-JAX f32 reference of DQNetwork.forward."""
    w1, b1, w2, b2, w3, b3 = params
    h1 = jnp.maximum(x @ w1 + b1, 0.0)
    h2 = jnp.maximum(h1 @ w2 + b2, 0.0)
    return h2 @ w3 + b3


def dqn_forward_ref_mixed(x, params):
    """Pure-JAX reference using the same bf16-matmul / f32-accumulate recipe."""
    w1, b1, w2, b2, w3, b3 = params
    bf = jnp.bfloat16
    h1 = jnp.maximum(
        jnp.dot(x.astype(bf), w1.astype(bf), preferred_element_type=jnp.float32) + b1, 0.0)
    h2 = jnp.maximum(
        jnp.dot(h1.astype(bf), w2.astype(bf), preferred_element_type=jnp.float32) + b2, 0.0)
    return jnp.dot(h2.astype(bf), w3.astype(bf),
                   preferred_element_type=jnp.float32) + b3


if __name__ == "__main__":
    observation_length = 32   # small synthetic observation size
    n_actions = 8             # small synthetic action space
    batch = 2                 # NOTE: batch this up in real acting/replay loops

    key = jax.random.PRNGKey(0)
    k_params, k_x = jax.random.split(key)

    params = init_params(k_params, observation_length, n_actions)
    x = jax.random.normal(k_x, (batch, observation_length), jnp.float32)

    out = dqn_forward(x, params)
    out = jax.block_until_ready(out)

    ref_mixed = dqn_forward_ref_mixed(x, params)
    ref_f32 = dqn_forward_ref_f32(x, params)

    assert out.shape == (batch, n_actions)
    # Tight check against the same mixed-precision recipe (bf16 MXU, f32 acc).
    assert jnp.allclose(out, ref_mixed, atol=2e-3, rtol=2e-3), \
        "Pallas output mismatch vs mixed-precision reference"
    # Loose check against the pure-f32 PyTorch-equivalent math.
    assert jnp.allclose(out, ref_f32, atol=5e-2, rtol=5e-2), \
        "Pallas output mismatch vs f32 reference"

    # Also exercise a larger, non-aligned replay-style batch (multi-tile grid).
    xb = jax.random.normal(jax.random.PRNGKey(1), (1000, observation_length), jnp.float32)
    outb = jax.block_until_ready(dqn_forward(xb, params))
    assert outb.shape == (1000, n_actions)
    assert jnp.allclose(outb, dqn_forward_ref_mixed(xb, params), atol=2e-3, rtol=2e-3), \
        "Pallas output mismatch vs mixed-precision reference (large batch)"

    print("KERNEL_OK")
</pallas_src>

<mosaic_0001>
module attributes {stable_mosaic.version = 11 : i64} {
  func.func @dqn_mlp_kernel(%arg0: i32, %arg1: memref<8x32xbf16, #tpu.memory_space<vmem>>, %arg2: memref<32x128xbf16, #tpu.memory_space<vmem>>, %arg3: memref<1x128xf32, #tpu.memory_space<vmem>>, %arg4: memref<128x128xbf16, #tpu.memory_space<vmem>>, %arg5: memref<1x128xf32, #tpu.memory_space<vmem>>, %arg6: memref<128x128xbf16, #tpu.memory_space<vmem>>, %arg7: memref<1x128xf32, #tpu.memory_space<vmem>>, %arg8: memref<8x128xf32, #tpu.memory_space<vmem>>) attributes {dimension_semantics = [#tpu.dimension_semantics<parallel>], iteration_bounds = array<i64: 1>, scalar_prefetch = 0 : i64, scratch_operands = 0 : i64, tpu.core_type = #tpu.core_type<tc>, window_params = [{transform_indices = @transform_0, window_bounds = array<i64: 8, 32>}, {pipeline_mode = #tpu.pipeline_mode<synchronous>, transform_indices = @transform_1, window_bounds = array<i64: 32, 128>}, {pipeline_mode = #tpu.pipeline_mode<synchronous>, transform_indices = @transform_2, window_bounds = array<i64: 1, 128>}, {pipeline_mode = #tpu.pipeline_mode<synchronous>, transform_indices = @transform_3, window_bounds = array<i64: 128, 128>}, {pipeline_mode = #tpu.pipeline_mode<synchronous>, transform_indices = @transform_4, window_bounds = array<i64: 1, 128>}, {pipeline_mode = #tpu.pipeline_mode<synchronous>, transform_indices = @transform_5, window_bounds = array<i64: 128, 128>}, {pipeline_mode = #tpu.pipeline_mode<synchronous>, transform_indices = @transform_6, window_bounds = array<i64: 1, 128>}, {transform_indices = @transform_7, window_bounds = array<i64: 8, 128>}]} {
    %c0 = arith.constant 0 : index
    %c0_0 = arith.constant 0 : index
    %0 = vector.load %arg1[%c0, %c0_0] : memref<8x32xbf16, #tpu.memory_space<vmem>>, vector<8x32xbf16>
    %c0_1 = arith.constant 0 : index
    %c0_2 = arith.constant 0 : index
    %1 = vector.load %arg2[%c0_1, %c0_2] : memref<32x128xbf16, #tpu.memory_space<vmem>>, vector<32x128xbf16>
    %cst = arith.constant dense<0.000000e+00> : vector<8x128xf32>
    %2 = tpu.matmul %0, %1, %cst {dimension_numbers = #tpu.dot_dimension_numbers<[1], [0], [0], [1], [0, 0, 1, 1], [], []>} : vector<8x32xbf16>, vector<32x128xbf16>, vector<8x128xf32> -> vector<8x128xf32>
    %c0_3 = arith.constant 0 : index
    %c0_4 = arith.constant 0 : index
    %3 = vector.load %arg3[%c0_3, %c0_4] : memref<1x128xf32, #tpu.memory_space<vmem>>, vector<1x128xf32>
    %4 = vector.broadcast %3 : vector<1x128xf32> to vector<8x128xf32>
    %5 = arith.addf %2, %4 : vector<8x128xf32>
    %cst_5 = arith.constant 0.000000e+00 : f32
    %6 = vector.broadcast %cst_5 : f32 to vector<8x128xf32>
    %7 = arith.maximumf %5, %6 : vector<8x128xf32>
    %8 = arith.truncf %7 : vector<8x128xf32> to vector<8x128xbf16>
    %c0_6 = arith.constant 0 : index
    %c0_7 = arith.constant 0 : index
    %9 = vector.load %arg4[%c0_6, %c0_7] : memref<128x128xbf16, #tpu.memory_space<vmem>>, vector<128x128xbf16>
    %cst_8 = arith.constant dense<0.000000e+00> : vector<8x128xf32>
    %10 = tpu.matmul %8, %9, %cst_8 {dimension_numbers = #tpu.dot_dimension_numbers<[1], [0], [0], [1], [0, 0, 1, 1], [], []>} : vector<8x128xbf16>, vector<128x128xbf16>, vector<8x128xf32> -> vector<8x128xf32>
    %c0_9 = arith.constant 0 : index
    %c0_10 = arith.constant 0 : index
    %11 = vector.load %arg5[%c0_9, %c0_10] : memref<1x128xf32, #tpu.memory_space<vmem>>, vector<1x128xf32>
    %12 = vector.broadcast %11 : vector<1x128xf32> to vector<8x128xf32>
    %13 = arith.addf %10, %12 : vector<8x128xf32>
    %cst_11 = arith.constant 0.000000e+00 : f32
    %14 = vector.broadcast %cst_11 : f32 to vector<8x128xf32>
    %15 = arith.maximumf %13, %14 : vector<8x128xf32>
    %16 = arith.truncf %15 : vector<8x128xf32> to vector<8x128xbf16>
    %c0_12 = arith.constant 0 : index
    %c0_13 = arith.constant 0 : index
    %17 = vector.load %arg6[%c0_12, %c0_13] : memref<128x128xbf16, #tpu.memory_space<vmem>>, vector<128x128xbf16>
    %cst_14 = arith.constant dense<0.000000e+00> : vector<8x128xf32>
    %18 = tpu.matmul %16, %17, %cst_14 {dimension_numbers = #tpu.dot_dimension_numbers<[1], [0], [0], [1], [0, 0, 1, 1], [], []>} : vector<8x128xbf16>, vector<128x128xbf16>, vector<8x128xf32> -> vector<8x128xf32>
    %c0_15 = arith.constant 0 : index
    %c0_16 = arith.constant 0 : index
    %19 = vector.load %arg7[%c0_15, %c0_16] : memref<1x128xf32, #tpu.memory_space<vmem>>, vector<1x128xf32>
    %20 = vector.broadcast %19 : vector<1x128xf32> to vector<8x128xf32>
    %21 = arith.addf %18, %20 : vector<8x128xf32>
    %c0_17 = arith.constant 0 : index
    %c0_18 = arith.constant 0 : index
    %22 = vector.load %arg8[%c0_17, %c0_18] : memref<8x128xf32, #tpu.memory_space<vmem>>, vector<8x128xf32>
    tpu.vector_store %arg8[%c0_17, %c0_18], %21 {strides = array<i32>} : memref<8x128xf32, #tpu.memory_space<vmem>>, vector<8x128xf32>,
    return
  }
  func.func @transform_0(%arg0: i32) -> (i32, i32) {
    %c0_i32 = arith.constant 0 : i32
    %c0_i32_0 = arith.constant 0 : i32
    return %arg0, %c0_i32 : i32, i32
  }
  func.func @transform_1(%arg0: i32) -> (i32, i32) {
    %c0_i32 = arith.constant 0 : i32
    %c0_i32_0 = arith.constant 0 : i32
    %c0_i32_1 = arith.constant 0 : i32
    return %c0_i32, %c0_i32_0 : i32, i32
  }
  func.func @transform_2(%arg0: i32) -> (i32, i32) {
    %c0_i32 = arith.constant 0 : i32
    %c0_i32_0 = arith.constant 0 : i32
    %c0_i32_1 = arith.constant 0 : i32
    return %c0_i32, %c0_i32_0 : i32, i32
  }
  func.func @transform_3(%arg0: i32) -> (i32, i32) {
    %c0_i32 = arith.constant 0 : i32
    %c0_i32_0 = arith.constant 0 : i32
    %c0_i32_1 = arith.constant 0 : i32
    return %c0_i32, %c0_i32_0 : i32, i32
  }
  func.func @transform_4(%arg0: i32) -> (i32, i32) {
    %c0_i32 = arith.constant 0 : i32
    %c0_i32_0 = arith.constant 0 : i32
    %c0_i32_1 = arith.constant 0 : i32
    return %c0_i32, %c0_i32_0 : i32, i32
  }
  func.func @transform_5(%arg0: i32) -> (i32, i32) {
    %c0_i32 = arith.constant 0 : i32
    %c0_i32_0 = arith.constant 0 : i32
    %c0_i32_1 = arith.constant 0 : i32
    return %c0_i32, %c0_i32_0 : i32, i32
  }
  func.func @transform_6(%arg0: i32) -> (i32, i32) {
    %c0_i32 = arith.constant 0 : i32
    %c0_i32_0 = arith.constant 0 : i32
    %c0_i32_1 = arith.constant 0 : i32
    return %c0_i32, %c0_i32_0 : i32, i32
  }
  func.func @transform_7(%arg0: i32) -> (i32, i32) {
    %c0_i32 = arith.constant 0 : i32
    %c0_i32_0 = arith.constant 0 : i32
    return %arg0, %c0_i32 : i32, i32
  }
}

</mosaic_0001>

<llo_original>
// kernel: dqn_forward.1
$region0: #{dqn_forward.1}
  #allocation0 [shape = 'u32[]', space=smem, size = 0x4, offset = 0x4, fixed_abs, tag = 'smem constant byte address 0x4 - core index']
  #allocation1 [shape = 'u32[144,128]{1,0:T(1,128)}', space=vmem, size = 0x12000, scoped, tag = 'internal scratch']
  %s0 = inlined_call_operand.vmem [shape: bf16[8,32], index: 0, kind: input, shape index: {}]
  %s1 = inlined_call_operand.vmem [shape: bf16[32,128], index: 1, kind: input, shape index: {}]
  %s2 = inlined_call_operand.vmem [shape: f32[1,128], index: 2, kind: input, shape index: {}]
  %s3 = inlined_call_operand.vmem [shape: bf16[128,128], index: 3, kind: input, shape index: {}]
  %s4 = inlined_call_operand.vmem [shape: f32[1,128], index: 4, kind: input, shape index: {}]
  %s5 = inlined_call_operand.vmem [shape: bf16[128,128], index: 5, kind: input, shape index: {}]
  %s6 = inlined_call_operand.vmem [shape: f32[1,128], index: 6, kind: input, shape index: {}]
  %s7 = inlined_call_operand.vmem [shape: f32[8,128], index: 7, kind: output, shape index: {}]
  %s8 = sld [smem:[#allocation0]]
  $region38: #{dqn_forward.1} parent=0
    _
  %s10 = ssub.s32 1, %s8
  %s11 = scalar_select 0, %s10, %s8
  // Predicated region
  $region2: #{dqn_forward.1} parent=0 // pred_check
    _
  $region3: #{dqn_forward.1} parent=0 // pred_check_branch
    %13 = sbr.rel (0) target = $region5
  $region4: #{dqn_forward.1} parent=0 // pred_region
    _
  $region5: #{dqn_forward.1} parent=0 // pred_fallthru
    _
  // Predicated region
  $region6: #{dqn_forward.1} parent=0 // pred_check
    _
  $region7: #{dqn_forward.1} parent=0 // pred_check_branch
    %15 = sbr.rel (0) target = $region9
  $region8: #{dqn_forward.1} parent=0 // pred_region
    _
  $region9: #{dqn_forward.1} parent=0 // pred_fallthru
    _
  // Predicated region
  $region10: #{dqn_forward.1} parent=0 // pred_check
    _
  $region11: #{dqn_forward.1} parent=0 // pred_check_branch
    %17 = sbr.rel (0) target = $region13
  $region12: #{dqn_forward.1} parent=0 // pred_region
    _
  $region13: #{dqn_forward.1} parent=0 // pred_fallthru
    _
  // Predicated region
  $region14: #{dqn_forward.1} parent=0 // pred_check
    _
  $region15: #{dqn_forward.1} parent=0 // pred_check_branch
    %19 = sbr.rel (0) target = $region17
  $region16: #{dqn_forward.1} parent=0 // pred_region
    _
  $region17: #{dqn_forward.1} parent=0 // pred_fallthru
    _
  // Predicated region
  $region18: #{dqn_forward.1} parent=0 // pred_check
    _
  $region19: #{dqn_forward.1} parent=0 // pred_check_branch
    %21 = sbr.rel (0) target = $region21
  $region20: #{dqn_forward.1} parent=0 // pred_region
    _
  $region21: #{dqn_forward.1} parent=0 // pred_fallthru
    _
  // Predicated region
  $region22: #{dqn_forward.1} parent=0 // pred_check
    _
  $region23: #{dqn_forward.1} parent=0 // pred_check_branch
    %23 = sbr.rel (0) target = $region25
  $region24: #{dqn_forward.1} parent=0 // pred_region
    _
  $region25: #{dqn_forward.1} parent=0 // pred_fallthru
    _
  // Predicated region
  $region26: #{dqn_forward.1} parent=0 // pred_check
    _
  $region27: #{dqn_forward.1} parent=0 // pred_check_branch
    %25 = sbr.rel (0) target = $region29
  $region28: #{dqn_forward.1} parent=0 // pred_region
    _
  $region29: #{dqn_forward.1} parent=0 // pred_fallthru
    _
  %v27 = vld [vmem:[%s0] sm:$0xf]
  %v28 = vld [vmem:[%s1] sm:$0xf]
  %v29 = vld [vmem:[%s1 + $0x4] sm:$0xf]
  %v30 = vld [vmem:[%s1 + $0x8] sm:$0xf]
  %v31 = vld [vmem:[%s1 + $0xc] sm:$0xf]
  %v32 = vld [vmem:[%s2] sm:$0x1]
  %v34 = vlaneseq
  %v35 = vshrl.u32 %v34, 7
  %v36 = vsub.s32 0, %v35
  %v37 = vrot.slane %v32, %v36
  %v43 = vunpack.c.l.b16 %v28
  %v44 = vunpack.c.l.b16 %v29
  %v45 = vunpack.c.l.b16 %v30
  %v46 = vunpack.c.l.b16 %v31
  %v47 = vpack.c.b16 %v44, %v43
  %v48 = vpack.c.b16 %v46, %v45
  %vm51 = vcmask 261120
  %v53 = vsel %vm51, %v27, 0
  %55 = vmatprep.subr.bf16.mxu0 0
  %56 = vmatpush1.bf16.msra.mxu0 %v47
  %57 = vmatprep.subr.bf16.mxu0 0
  %58 = vmatpush1.bf16.msra.mxu0 %v48
  %59 = vmatprep.subr.bf16.mxu0 0
  %60 = vmatpush1.bf16.msra.mxu0 0
  %61 = vmatprep.subr.bf16.mxu0 0
  %62 = vmatpush1.bf16.msra.mxu0 0
  %63 = vmatprep.subr.bf16.mxu0 0
  %64 = vmatpush1.bf16.msra.mxu0 0
  %65 = vmatprep.subr.bf16.mxu0 0
  %66 = vmatpush1.bf16.msra.mxu0 0
  %67 = vmatprep.subr.bf16.mxu0 0
  %68 = vmatpush1.bf16.msra.mxu0 0
  %69 = vmatprep.subr.bf16.mxu0 0
  %70 = vmatpush1.bf16.msra.mxu0 0
  %71 = vmatprep.subr.bf16.mxu0 0
  %72 = vmatpush1.bf16.msra.mxu0 0
  %73 = vmatprep.subr.bf16.mxu0 0
  %74 = vmatpush1.bf16.msra.mxu0 0
  %75 = vmatprep.subr.bf16.mxu0 0
  %76 = vmatpush1.bf16.msra.mxu0 0
  %77 = vmatprep.subr.bf16.mxu0 0
  %78 = vmatpush1.bf16.msra.mxu0 0
  %79 = vmatprep.subr.bf16.mxu0 0
  %80 = vmatpush1.bf16.msra.mxu0 0
  %81 = vmatprep.subr.bf16.mxu0 0
  %82 = vmatpush1.bf16.msra.mxu0 0
  %83 = vmatprep.subr.bf16.mxu0 0
  %84 = vmatpush1.bf16.msra.mxu0 0
  %85 = vmatprep.subr.bf16.mxu0 0
  %86 = vmatpush1.bf16.msra.mxu0 0
  %87 = vmatprep.mubr.bf16.mxu0 0
  %88 = vmatmul.mubr.bf16.gmra.mrb[0].mxu0 %v53
  %v89 = vpop.f32.mrb[0].mxu0
  %v90 = vadd.f32 %v37, %v89
  %v91 = vpop.f32.mrb[0].mxu0
  %v92 = vpop.f32.mrb[0].mxu0
  %v93 = vpop.f32.mrb[0].mxu0
  %94 = vdwg.mxu0
  %v95 = vmax.f32 %v90, 0.0
  %v96 = vpack.c.bf16 %v95, %v95
  %v97 = vld [vmem:[%s3] sm:$0xf]
  %v98 = vld [vmem:[%s3 + $0x4] sm:$0xf]
  %v99 = vld [vmem:[%s3 + $0x8] sm:$0xf]
  %v100 = vld [vmem:[%s3 + $0xc] sm:$0xf]
  %v101 = vld [vmem:[%s3 + $0x10] sm:$0xf]
  %v102 = vld [vmem:[%s3 + $0x14] sm:$0xf]
  %v103 = vld [vmem:[%s3 + $0x18] sm:$0xf]
  %v104 = vld [vmem:[%s3 + $0x1c] sm:$0xf]
  %v105 = vld [vmem:[%s3 + $0x20] sm:$0xf]
  %v106 = vld [vmem:[%s3 + $0x24] sm:$0xf]
  %v107 = vld [vmem:[%s3 + $0x28] sm:$0xf]
  %v108 = vld [vmem:[%s3 + $0x2c] sm:$0xf]
  %v109 = vld [vmem:[%s3 + $0x30] sm:$0xf]
  %v110 = vld [vmem:[%s3 + $0x34] sm:$0xf]
  %v111 = vld [vmem:[%s3 + $0x38] sm:$0xf]
  %v112 = vld [vmem:[%s3 + $0x3c] sm:$0xf]
  %v113 = vld [vmem:[%s4] sm:$0x1]
  %v115 = vlaneseq
  %v116 = vshrl.u32 %v115, 7
  %v117 = vsub.s32 0, %v116
  %v118 = vrot.slane %v113, %v117
  %v136 = vunpack.c.l.b16 %v97
  %v137 = vunpack.c.l.b16 %v98
  %v138 = vunpack.c.l.b16 %v99
  %v139 = vunpack.c.l.b16 %v100
  %v140 = vunpack.c.l.b16 %v101
  %v141 = vunpack.c.l.b16 %v102
  %v142 = vunpack.c.l.b16 %v103
  %v143 = vunpack.c.l.b16 %v104
  %v144 = vunpack.c.l.b16 %v105
  %v145 = vunpack.c.l.b16 %v106
  %v146 = vunpack.c.l.b16 %v107
  %v147 = vunpack.c.l.b16 %v108
  %v148 = vunpack.c.l.b16 %v109
  %v149 = vunpack.c.l.b16 %v110
  %v150 = vunpack.c.l.b16 %v111
  %v151 = vunpack.c.l.b16 %v112
  %v152 = vpack.c.b16 %v137, %v136
  %v153 = vpack.c.b16 %v139, %v138
  %v154 = vpack.c.b16 %v141, %v140
  %v155 = vpack.c.b16 %v143, %v142
  %v156 = vpack.c.b16 %v145, %v144
  %v157 = vpack.c.b16 %v147, %v146
  %v158 = vpack.c.b16 %v149, %v148
  %v159 = vpack.c.b16 %v151, %v150
  %168 = vmatprep.subr.bf16.mxu0 0
  %169 = vmatpush1.bf16.msra.mxu0 %v152
  %170 = vmatprep.subr.bf16.mxu0 0
  %171 = vmatpush1.bf16.msra.mxu0 %v153
  %172 = vmatprep.subr.bf16.mxu0 0
  %173 = vmatpush1.bf16.msra.mxu0 %v154
  %174 = vmatprep.subr.bf16.mxu0 0
  %175 = vmatpush1.bf16.msra.mxu0 %v155
  %176 = vmatprep.subr.bf16.mxu0 0
  %177 = vmatpush1.bf16.msra.mxu0 %v156
  %178 = vmatprep.subr.bf16.mxu0 0
  %179 = vmatpush1.bf16.msra.mxu0 %v157
  %180 = vmatprep.subr.bf16.mxu0 0
  %181 = vmatpush1.bf16.msra.mxu0 %v158
  %182 = vmatprep.subr.bf16.mxu0 0
  %183 = vmatpush1.bf16.msra.mxu0 %v159
  %184 = vmatprep.subr.bf16.mxu0 0
  %185 = vmatpush1.bf16.msra.mxu0 0
  %186 = vmatprep.subr.bf16.mxu0 0
  %187 = vmatpush1.bf16.msra.mxu0 0
  %188 = vmatprep.subr.bf16.mxu0 0
  %189 = vmatpush1.bf16.msra.mxu0 0
  %190 = vmatprep.subr.bf16.mxu0 0
  %191 = vmatpush1.bf16.msra.mxu0 0
  %192 = vmatprep.subr.bf16.mxu0 0
  %193 = vmatpush1.bf16.msra.mxu0 0
  %194 = vmatprep.subr.bf16.mxu0 0
  %195 = vmatpush1.bf16.msra.mxu0 0
  %196 = vmatprep.subr.bf16.mxu0 0
  %197 = vmatpush1.bf16.msra.mxu0 0
  %198 = vmatprep.subr.bf16.mxu0 0
  %199 = vmatpush1.bf16.msra.mxu0 0
  %200 = vmatprep.mubr.bf16.mxu0 0
  %201 = vmatmul.mubr.bf16.gmra.mrb[0].mxu0 %v96
  %v202 = vpop.f32.mrb[0].mxu0
  %v203 = vadd.f32 %v118, %v202
  %v204 = vpop.f32.mrb[0].mxu0
  %v205 = vpop.f32.mrb[0].mxu0
  %v206 = vpop.f32.mrb[0].mxu0
  %207 = vdwg.mxu0
  %v208 = vmax.f32 %v203, 0.0
  %v209 = vpack.c.bf16 %v208, %v208
  %v210 = vld [vmem:[%s5] sm:$0xf]
  %v211 = vld [vmem:[%s5 + $0x4] sm:$0xf]
  %v212 = vld [vmem:[%s5 + $0x8] sm:$0xf]
  %v213 = vld [vmem:[%s5 + $0xc] sm:$0xf]
  %v214 = vld [vmem:[%s5 + $0x10] sm:$0xf]
  %v215 = vld [vmem:[%s5 + $0x14] sm:$0xf]
  %v216 = vld [vmem:[%s5 + $0x18] sm:$0xf]
  %v217 = vld [vmem:[%s5 + $0x1c] sm:$0xf]
  %v218 = vld [vmem:[%s5 + $0x20] sm:$0xf]
  %v219 = vld [vmem:[%s5 + $0x24] sm:$0xf]
  %v220 = vld [vmem:[%s5 + $0x28] sm:$0xf]
  %v221 = vld [vmem:[%s5 + $0x2c] sm:$0xf]
  %v222 = vld [vmem:[%s5 + $0x30] sm:$0xf]
  %v223 = vld [vmem:[%s5 + $0x34] sm:$0xf]
  %v224 = vld [vmem:[%s5 + $0x38] sm:$0xf]
  %v225 = vld [vmem:[%s5 + $0x3c] sm:$0xf]
  %v226 = vld [vmem:[%s6] sm:$0x1]
  %v228 = vlaneseq
  %v229 = vshrl.u32 %v228, 7
  %v230 = vsub.s32 0, %v229
  %v231 = vrot.slane %v226, %v230
  %v249 = vunpack.c.l.b16 %v210
  %v250 = vunpack.c.l.b16 %v211
  %v251 = vunpack.c.l.b16 %v212
  %v252 = vunpack.c.l.b16 %v213
  %v253 = vunpack.c.l.b16 %v214
  %v254 = vunpack.c.l.b16 %v215
  %v255 = vunpack.c.l.b16 %v216
  %v256 = vunpack.c.l.b16 %v217
  %v257 = vunpack.c.l.b16 %v218
  %v258 = vunpack.c.l.b16 %v219
  %v259 = vunpack.c.l.b16 %v220
  %v260 = vunpack.c.l.b16 %v221
  %v261 = vunpack.c.l.b16 %v222
  %v262 = vunpack.c.l.b16 %v223
  %v263 = vunpack.c.l.b16 %v224
  %v264 = vunpack.c.l.b16 %v225
  %v265 = vpack.c.b16 %v250, %v249
  %v266 = vpack.c.b16 %v252, %v251
  %v267 = vpack.c.b16 %v254, %v253
  %v268 = vpack.c.b16 %v256, %v255
  %v269 = vpack.c.b16 %v258, %v257
  %v270 = vpack.c.b16 %v260, %v259
  %v271 = vpack.c.b16 %v262, %v261
  %v272 = vpack.c.b16 %v264, %v263
  %281 = vmatprep.subr.bf16.mxu0 0
  %282 = vmatpush1.bf16.msra.mxu0 %v265
  %283 = vmatprep.subr.bf16.mxu0 0
  %284 = vmatpush1.bf16.msra.mxu0 %v266
  %285 = vmatprep.subr.bf16.mxu0 0
  %286 = vmatpush1.bf16.msra.mxu0 %v267
  %287 = vmatprep.subr.bf16.mxu0 0
  %288 = vmatpush1.bf16.msra.mxu0 %v268
  %289 = vmatprep.subr.bf16.mxu0 0
  %290 = vmatpush1.bf16.msra.mxu0 %v269
  %291 = vmatprep.subr.bf16.mxu0 0
  %292 = vmatpush1.bf16.msra.mxu0 %v270
  %293 = vmatprep.subr.bf16.mxu0 0
  %294 = vmatpush1.bf16.msra.mxu0 %v271
  %295 = vmatprep.subr.bf16.mxu0 0
  %296 = vmatpush1.bf16.msra.mxu0 %v272
  %297 = vmatprep.subr.bf16.mxu0 0
  %298 = vmatpush1.bf16.msra.mxu0 0
  %299 = vmatprep.subr.bf16.mxu0 0
  %300 = vmatpush1.bf16.msra.mxu0 0
  %301 = vmatprep.subr.bf16.mxu0 0
  %302 = vmatpush1.bf16.msra.mxu0 0
  %303 = vmatprep.subr.bf16.mxu0 0
  %304 = vmatpush1.bf16.msra.mxu0 0
  %305 = vmatprep.subr.bf16.mxu0 0
  %306 = vmatpush1.bf16.msra.mxu0 0
  %307 = vmatprep.subr.bf16.mxu0 0
  %308 = vmatpush1.bf16.msra.mxu0 0
  %309 = vmatprep.subr.bf16.mxu0 0
  %310 = vmatpush1.bf16.msra.mxu0 0
  %311 = vmatprep.subr.bf16.mxu0 0
  %312 = vmatpush1.bf16.msra.mxu0 0
  %313 = vmatprep.mubr.bf16.mxu0 0
  %314 = vmatmul.mubr.bf16.gmra.mrb[0].mxu0 %v209
  %v315 = vpop.f32.mrb[0].mxu0
  %v316 = vadd.f32 %v231, %v315
  %v317 = vpop.f32.mrb[0].mxu0
  %v318 = vpop.f32.mrb[0].mxu0
  %v319 = vpop.f32.mrb[0].mxu0
  %320 = vdwg.mxu0
  %321 = vst [vmem:[%s7] sm:$0xff] %v316
  // Predicated region
  $region30: #{dqn_forward.1} parent=0 // pred_check
    _
  $region31: #{dqn_forward.1} parent=0 // pred_check_branch
    %323 = sbr.rel (0) target = $region33
  $region32: #{dqn_forward.1} parent=0 // pred_region
    _
  $region33: #{dqn_forward.1} parent=0 // pred_fallthru
    _
  // Predicated region
  $region34: #{dqn_forward.1} parent=0 // pred_check
    _
  $region35: #{dqn_forward.1} parent=0 // pred_check_branch
    %325 = sbr.rel (0) target = $region37
  $region36: #{dqn_forward.1} parent=0 // pred_region
    _
  $region37: #{dqn_forward.1} parent=0 // pred_fallthru
    _

</llo_original>
